<compile_context>
chip_gen: v5e
topology: v5e:2x2
jax: 0.10.0
libtpu: 0.0.40
codegen_flags: <defaults>
</compile_context>

<pallas_src>
import jax
import jax.numpy as jnp
from jax.experimental import pallas as pl
from jax.experimental.pallas import tpu as pltpu

HIDDEN_1 = 512
HIDDEN_2 = 256
BM_MAX = 512   # largest batch tile (amortizes per-step cost on v5e/v6e)


def _round_up(n, m):
    return ((n + m - 1) // m) * m


def _choose_bm(B):
    """Batch rows per grid step.

    B <= 8: single step (tiny batch, nothing to shard).
    B >  8: at least 2 grid steps so dimension_semantics=("parallel",) can
            shard the batch across the two v7x TensorCores, while keeping
            tiles as large as possible (<= 512) for v5e/v6e.
    """
    if B <= 8:
        return B
    return min(BM_MAX, max(8, _round_up(pl.cdiv(B, 2), 8)))


def _q_mlp_kernel(x_ref, a_ref, w1x_ref, w1a_ref, b1_ref,
                  w2_ref, b2_ref, w3_ref, b3_ref, out_ref):
    """One batch tile of the 3-layer critic MLP, entirely in VMEM."""
    # ---- layer 1 -----------------------------------------------------------
    # Observation part on the MXU (bf16 operands, f32 accumulation) plus the
    # torch `cat((x, a[i]), 1)` fused as a tiny K=A MXU dot with the action
    # rows of W1.
    x16 = x_ref[...].astype(jnp.bfloat16)                     # (bm, HW)
    a16 = a_ref[...].astype(jnp.bfloat16)                     # (bm, A)
    h1 = jnp.dot(x16, w1x_ref[...], preferred_element_type=jnp.float32)
    h1 = h1 + jnp.dot(a16, w1a_ref[...], preferred_element_type=jnp.float32)
    h1 = jnp.maximum(h1 + b1_ref[...], 0.0)                   # (bm, H1) f32

    # ---- layer 2 -----------------------------------------------------------
    h2 = jnp.dot(h1.astype(jnp.bfloat16), w2_ref[...],
                 preferred_element_type=jnp.float32)
    h2 = jnp.maximum(h2 + b2_ref[...], 0.0)                   # (bm, H2) f32

    # ---- layer 3 (K=256 -> N=1): VPU multiply + lane reduction (exact f32) --
    q = jnp.sum(h2 * w3_ref[...], axis=-1, keepdims=True)     # (bm, 1)
    # b3 arrives as an SMEM scalar; the (bm, 1) store is lane-sparse but only
    # a few bytes per tile (fine up to hundreds of batch rows).
    out_ref[...] = q + b3_ref[0, 0]


@jax.jit
def q_forward(x, a, params):
    """x: (B, H, W) f32, a: (A, B, 1) f32 -> (B, 1) f32 Q-values."""
    B = x.shape[0]
    A = a.shape[0]
    x_flat = x.reshape(B, -1)                                  # torch .view (free)
    HW = x_flat.shape[1]
    # Lane-dense action layout: column j of a_mat is a[j][:, 0], matching the
    # torch cat order, so dot(a_mat, w1a) reproduces the action columns of h1.
    a_mat = jnp.transpose(a, (1, 0, 2)).reshape(B, A)          # (B, A)

    bm = _choose_bm(B)
    grid = (pl.cdiv(B, bm),)
    resident = lambda i: (0, 0)                                # weights stay put

    return pl.pallas_call(
        _q_mlp_kernel,
        out_shape=jax.ShapeDtypeStruct((B, 1), jnp.float32),
        grid=grid,
        in_specs=[
            pl.BlockSpec((bm, HW), lambda i: (i, 0)),          # x tile
            pl.BlockSpec((bm, A), lambda i: (i, 0)),           # action tile
            pl.BlockSpec((HW, HIDDEN_1), resident),            # W1 obs rows (bf16)
            pl.BlockSpec((A, HIDDEN_1), resident),             # W1 action rows (bf16)
            pl.BlockSpec((1, HIDDEN_1), resident),             # b1 (f32)
            pl.BlockSpec((HIDDEN_1, HIDDEN_2), resident),      # W2 (bf16)
            pl.BlockSpec((1, HIDDEN_2), resident),             # b2 (f32)
            pl.BlockSpec((1, HIDDEN_2), resident),             # w3 row (f32)
            pl.BlockSpec(memory_space=pltpu.MemorySpace.SMEM), # b3 scalar
        ],
        out_specs=pl.BlockSpec((bm, 1), lambda i: (i, 0)),
        compiler_params=pltpu.CompilerParams(
            dimension_semantics=("parallel",)),
    )(x_flat, a_mat, params["w1x"], params["w1a"], params["b1"],
      params["w2"], params["b2"], params["w3_row"], params["b3"])


def init_params(key, inputs1d, actions):
    """PyTorch-Linear-style init (uniform +/- 1/sqrt(fan_in)).

    W1 is pre-split into observation rows / action rows (fuses the cat), and
    the three large matrices are stored in bf16 (halves the weight stream).
    """
    d_in = inputs1d + actions
    ks = jax.random.split(key, 6)

    def lin(kw, kb, fan_in, fan_out):
        bound = 1.0 / jnp.sqrt(float(fan_in))
        w = jax.random.uniform(kw, (fan_in, fan_out), jnp.float32, -bound, bound)
        b = jax.random.uniform(kb, (1, fan_out), jnp.float32, -bound, bound)
        return w, b

    w1, b1 = lin(ks[0], ks[1], d_in, HIDDEN_1)
    w2, b2 = lin(ks[2], ks[3], HIDDEN_1, HIDDEN_2)
    w3, b3 = lin(ks[4], ks[5], HIDDEN_2, 1)
    return {
        "w1x": w1[:inputs1d].astype(jnp.bfloat16),   # (HW, 512)
        "w1a": w1[inputs1d:].astype(jnp.bfloat16),   # (A, 512)
        "b1": b1,                                    # (1, 512) f32
        "w2": w2.astype(jnp.bfloat16),               # (512, 256)
        "b2": b2,                                    # (1, 256) f32
        "w3_row": w3.T,                              # (1, 256) f32 lane-dense
        "b3": b3,                                    # (1, 1) f32
    }


def reference_forward(x, a, params):
    """Plain-JAX mirror of the PyTorch module (concat + 3 Linear layers),
    evaluated with the same (bf16-stored) weight values as the kernel."""
    B = x.shape[0]
    h = x.reshape(B, -1)
    for i in range(a.shape[0]):                    # torch cat loop
        h = jnp.concatenate([h, a[i]], axis=1)
    w1 = jnp.concatenate([params["w1x"], params["w1a"]], axis=0).astype(jnp.float32)
    h = jnp.maximum(h @ w1 + params["b1"], 0.0)
    h = jnp.maximum(h @ params["w2"].astype(jnp.float32) + params["b2"], 0.0)
    return h @ params["w3_row"].T + params["b3"]


if __name__ == "__main__":
    key = jax.random.PRNGKey(0)
    k_x, k_a, k_p = jax.random.split(key, 3)

    inputs2D = (16, 16)          # observation grid -> inputs1D = 256
    actions = 3                  # e.g. steer / gas / brake
    batch = 2

    x = jax.random.normal(k_x, (batch,) + inputs2D, jnp.float32)
    a = jax.random.normal(k_a, (actions, batch, 1), jnp.float32)
    params = init_params(k_p, inputs2D[0] * inputs2D[1], actions)

    out = q_forward(x, a, params)
    jax.block_until_ready(out)

    ref = reference_forward(x, a, params)
    assert out.shape == (batch, 1)
    # Tolerance covers bf16 weight storage plus MXU default-precision (bf16
    # operand) rounding, which both the kernel and the XLA reference use with
    # slightly different rounding points; structural errors would be orders
    # of magnitude larger.
    assert jnp.allclose(out, ref, atol=2e-2, rtol=2e-2), \
        float(jnp.max(jnp.abs(out - ref)))
    print("KERNEL_OK")
</pallas_src>

<mosaic_0001>
module attributes {stable_mosaic.version = 11 : i64} {
  func.func @_q_mlp_kernel(%arg0: i32, %arg1: memref<2x256xf32, #tpu.memory_space<vmem>>, %arg2: memref<2x3xf32, #tpu.memory_space<vmem>>, %arg3: memref<256x512xbf16, #tpu.memory_space<vmem>>, %arg4: memref<3x512xbf16, #tpu.memory_space<vmem>>, %arg5: memref<1x512xf32, #tpu.memory_space<vmem>>, %arg6: memref<512x256xbf16, #tpu.memory_space<vmem>>, %arg7: memref<1x256xf32, #tpu.memory_space<vmem>>, %arg8: memref<1x256xf32, #tpu.memory_space<vmem>>, %arg9: memref<1x1xf32, #tpu.memory_space<smem>>, %arg10: memref<2x1xf32, #tpu.memory_space<vmem>>) attributes {dimension_semantics = [#tpu.dimension_semantics<parallel>], iteration_bounds = array<i64: 1>, scalar_prefetch = 0 : i64, scratch_operands = 0 : i64, tpu.core_type = #tpu.core_type<tc>, window_params = [{transform_indices = @transform_0, window_bounds = array<i64: 2, 256>}, {transform_indices = @transform_1, window_bounds = array<i64: 2, 3>}, {pipeline_mode = #tpu.pipeline_mode<synchronous>, transform_indices = @transform_2, window_bounds = array<i64: 256, 512>}, {pipeline_mode = #tpu.pipeline_mode<synchronous>, transform_indices = @transform_3, window_bounds = array<i64: 3, 512>}, {pipeline_mode = #tpu.pipeline_mode<synchronous>, transform_indices = @transform_4, window_bounds = array<i64: 1, 512>}, {pipeline_mode = #tpu.pipeline_mode<synchronous>, transform_indices = @transform_5, window_bounds = array<i64: 512, 256>}, {pipeline_mode = #tpu.pipeline_mode<synchronous>, transform_indices = @transform_6, window_bounds = array<i64: 1, 256>}, {pipeline_mode = #tpu.pipeline_mode<synchronous>, transform_indices = @transform_7, window_bounds = array<i64: 1, 256>}, {transform_indices = @transform_8, window_bounds = array<i64: 1, 1>}, {transform_indices = @transform_9, window_bounds = array<i64: 2, 1>}]} {
    %c0 = arith.constant 0 : index
    %c0_0 = arith.constant 0 : index
    %0 = vector.load %arg1[%c0, %c0_0] : memref<2x256xf32, #tpu.memory_space<vmem>>, vector<2x256xf32>
    %1 = arith.truncf %0 : vector<2x256xf32> to vector<2x256xbf16>
    %c0_1 = arith.constant 0 : index
    %c0_2 = arith.constant 0 : index
    %2 = vector.load %arg2[%c0_1, %c0_2] : memref<2x3xf32, #tpu.memory_space<vmem>>, vector<2x3xf32>
    %3 = arith.truncf %2 : vector<2x3xf32> to vector<2x3xbf16>
    %c0_3 = arith.constant 0 : index
    %c0_4 = arith.constant 0 : index
    %4 = vector.load %arg3[%c0_3, %c0_4] : memref<256x512xbf16, #tpu.memory_space<vmem>>, vector<256x512xbf16>
    %cst = arith.constant dense<0.000000e+00> : vector<2x512xf32>
    %5 = tpu.matmul %1, %4, %cst {dimension_numbers = #tpu.dot_dimension_numbers<[1], [0], [0], [1], [0, 0, 1, 1], [], []>} : vector<2x256xbf16>, vector<256x512xbf16>, vector<2x512xf32> -> vector<2x512xf32>
    %c0_5 = arith.constant 0 : index
    %c0_6 = arith.constant 0 : index
    %6 = vector.load %arg4[%c0_5, %c0_6] : memref<3x512xbf16, #tpu.memory_space<vmem>>, vector<3x512xbf16>
    %cst_7 = arith.constant dense<0.000000e+00> : vector<2x512xf32>
    %7 = tpu.matmul %3, %6, %cst_7 {dimension_numbers = #tpu.dot_dimension_numbers<[1], [0], [0], [1], [0, 0, 1, 1], [], []>} : vector<2x3xbf16>, vector<3x512xbf16>, vector<2x512xf32> -> vector<2x512xf32>
    %8 = arith.addf %5, %7 : vector<2x512xf32>
    %c0_8 = arith.constant 0 : index
    %c0_9 = arith.constant 0 : index
    %9 = vector.load %arg5[%c0_8, %c0_9] : memref<1x512xf32, #tpu.memory_space<vmem>>, vector<1x512xf32>
    %10 = vector.broadcast %9 : vector<1x512xf32> to vector<2x512xf32>
    %11 = arith.addf %8, %10 : vector<2x512xf32>
    %cst_10 = arith.constant 0.000000e+00 : f32
    %12 = vector.broadcast %cst_10 : f32 to vector<2x512xf32>
    %13 = arith.maximumf %11, %12 : vector<2x512xf32>
    %14 = arith.truncf %13 : vector<2x512xf32> to vector<2x512xbf16>
    %c0_11 = arith.constant 0 : index
    %c0_12 = arith.constant 0 : index
    %15 = vector.load %arg6[%c0_11, %c0_12] : memref<512x256xbf16, #tpu.memory_space<vmem>>, vector<512x256xbf16>
    %cst_13 = arith.constant dense<0.000000e+00> : vector<2x256xf32>
    %16 = tpu.matmul %14, %15, %cst_13 {dimension_numbers = #tpu.dot_dimension_numbers<[1], [0], [0], [1], [0, 0, 1, 1], [], []>} : vector<2x512xbf16>, vector<512x256xbf16>, vector<2x256xf32> -> vector<2x256xf32>
    %c0_14 = arith.constant 0 : index
    %c0_15 = arith.constant 0 : index
    %17 = vector.load %arg7[%c0_14, %c0_15] : memref<1x256xf32, #tpu.memory_space<vmem>>, vector<1x256xf32>
    %18 = vector.broadcast %17 : vector<1x256xf32> to vector<2x256xf32>
    %19 = arith.addf %16, %18 : vector<2x256xf32>
    %cst_16 = arith.constant 0.000000e+00 : f32
    %20 = vector.broadcast %cst_16 : f32 to vector<2x256xf32>
    %21 = arith.maximumf %19, %20 : vector<2x256xf32>
    %c0_17 = arith.constant 0 : index
    %c0_18 = arith.constant 0 : index
    %22 = vector.load %arg8[%c0_17, %c0_18] : memref<1x256xf32, #tpu.memory_space<vmem>>, vector<1x256xf32>
    %23 = vector.broadcast %22 : vector<1x256xf32> to vector<2x256xf32>
    %24 = arith.mulf %21, %23 : vector<2x256xf32>
    %cst_19 = arith.constant dense<0.000000e+00> : vector<2xf32>
    %25 = vector.multi_reduction <add>, %24, %cst_19 [1] : vector<2x256xf32> to vector<2xf32>
    %26 = vector.shape_cast %25 : vector<2xf32> to vector<2x1xf32>
    %c0_20 = arith.constant 0 : index
    %c0_21 = arith.constant 0 : index
    %27 = memref.load %arg9[%c0_20, %c0_21] : memref<1x1xf32, #tpu.memory_space<smem>>
    %28 = vector.broadcast %27 : f32 to vector<2x1xf32>
    %29 = arith.addf %26, %28 : vector<2x1xf32>
    %c0_22 = arith.constant 0 : index
    %c0_23 = arith.constant 0 : index
    %30 = vector.load %arg10[%c0_22, %c0_23] : memref<2x1xf32, #tpu.memory_space<vmem>>, vector<2x1xf32>
    tpu.vector_store %arg10[%c0_22, %c0_23], %29 {strides = array<i32>} : memref<2x1xf32, #tpu.memory_space<vmem>>, vector<2x1xf32>,
    return
  }
  func.func @transform_0(%arg0: i32) -> (i32, i32) {
    %c0_i32 = arith.constant 0 : i32
    %c0_i32_0 = arith.constant 0 : i32
    return %arg0, %c0_i32 : i32, i32
  }
  func.func @transform_1(%arg0: i32) -> (i32, i32) {
    %c0_i32 = arith.constant 0 : i32
    %c0_i32_0 = arith.constant 0 : i32
    return %arg0, %c0_i32 : i32, i32
  }
  func.func @transform_2(%arg0: i32) -> (i32, i32) {
    %c0_i32 = arith.constant 0 : i32
    %c0_i32_0 = arith.constant 0 : i32
    %c0_i32_1 = arith.constant 0 : i32
    return %c0_i32, %c0_i32_0 : i32, i32
  }
  func.func @transform_3(%arg0: i32) -> (i32, i32) {
    %c0_i32 = arith.constant 0 : i32
    %c0_i32_0 = arith.constant 0 : i32
    %c0_i32_1 = arith.constant 0 : i32
    return %c0_i32, %c0_i32_0 : i32, i32
  }
  func.func @transform_4(%arg0: i32) -> (i32, i32) {
    %c0_i32 = arith.constant 0 : i32
    %c0_i32_0 = arith.constant 0 : i32
    %c0_i32_1 = arith.constant 0 : i32
    return %c0_i32, %c0_i32_0 : i32, i32
  }
  func.func @transform_5(%arg0: i32) -> (i32, i32) {
    %c0_i32 = arith.constant 0 : i32
    %c0_i32_0 = arith.constant 0 : i32
    %c0_i32_1 = arith.constant 0 : i32
    return %c0_i32, %c0_i32_0 : i32, i32
  }
  func.func @transform_6(%arg0: i32) -> (i32, i32) {
    %c0_i32 = arith.constant 0 : i32
    %c0_i32_0 = arith.constant 0 : i32
    %c0_i32_1 = arith.constant 0 : i32
    return %c0_i32, %c0_i32_0 : i32, i32
  }
  func.func @transform_7(%arg0: i32) -> (i32, i32) {
    %c0_i32 = arith.constant 0 : i32
    %c0_i32_0 = arith.constant 0 : i32
    %c0_i32_1 = arith.constant 0 : i32
    return %c0_i32, %c0_i32_0 : i32, i32
  }
  func.func @transform_8(%arg0: i32) -> (i32, i32) {
    %c0_i32 = arith.constant 0 : i32
    %c0_i32_0 = arith.constant 0 : i32
    %c0_i32_1 = arith.constant 0 : i32
    return %c0_i32, %c0_i32_0 : i32, i32
  }
  func.func @transform_9(%arg0: i32) -> (i32, i32) {
    %c0_i32 = arith.constant 0 : i32
    %c0_i32_0 = arith.constant 0 : i32
    return %arg0, %c0_i32 : i32, i32
  }
}

</mosaic_0001>

<llo_original>
// kernel: q_forward.1
$region0: #{q_forward.1}
  #allocation0 [shape = 'u32[]', space=smem, size = 0x4, offset = 0x4, fixed_abs, tag = 'smem constant byte address 0x4 - core index']
  #allocation1 [shape = 'u32[72,128]{1,0:T(1,128)}', space=vmem, size = 0x9000, scoped, tag = 'internal scratch']
  #allocation2 [shape = 'f32[1,1]{1,0:T(1,128)S(6)}', space=smem, size = 0x200, scoped, tag = 'scoped memory for q_forward.1']
  %s0 = inlined_call_operand.vmem [shape: f32[2,256], index: 0, kind: input, shape index: {}]
  %s1 = inlined_call_operand.vmem [shape: f32[2,3], index: 1, kind: input, shape index: {}]
  %s2 = inlined_call_operand.hbm [shape: bf16[256,512], index: 2, kind: input, shape index: {}]
  %s3 = inlined_call_operand.vmem [shape: bf16[3,512], index: 3, kind: input, shape index: {}]
  %s4 = inlined_call_operand.vmem [shape: f32[1,512], index: 4, kind: input, shape index: {}]
  %s5 = inlined_call_operand.hbm [shape: bf16[512,256], index: 5, kind: input, shape index: {}]
  %s6 = inlined_call_operand.vmem [shape: f32[1,256], index: 6, kind: input, shape index: {}]
  %s7 = inlined_call_operand.vmem [shape: f32[1,256], index: 7, kind: input, shape index: {}]
  %s8 = inlined_call_operand.<no memory space> [shape: f32[1,1], index: 8, kind: input, shape index: {}]
  %s9 = inlined_call_operand.vmem [shape: f32[2,1], index: 9, kind: output, shape index: {}]
  %s10 = sld [smem:[#allocation0]]
  $region54: #{q_forward.1} parent=0
    _
  %s12 = ssub.s32 1, %s10
  %s13 = scalar_select 0, %s12, %s10
  %14 = sst [smem:[#allocation2]] %s8
  $region1: #{q_forward.1} parent=0
    #allocation3 [shape = 'u8[262144]{0}', space=vmem, size = 0x40000, scoped, tag = 'input window, operand 2, single buffered']
    #allocation4 [shape = 's32[1]{0}', space=sflag, size = 0x4, scoped, tag = 'scoped memory for q_forward.1']
    #allocation5 [shape = 'u8[262144]{0}', space=vmem, size = 0x40000, scoped, tag = 'input window, operand 5, single buffered']
    #allocation6 [shape = 's32[1]{0}', space=sflag, size = 0x4, scoped, tag = 'scoped memory for q_forward.1']
    %15 = vsyncpa [#allocation4], 0
    %16 = vsyncpa [#allocation6], 0
    // Predicated region
    $region2: #{q_forward.1} parent=1 // pred_check
      _
    $region3: #{q_forward.1} parent=1 // pred_check_branch
      %18 = sbr.rel (0) target = $region5
    $region4: #{q_forward.1} parent=1 // pred_region
      _
    $region5: #{q_forward.1} parent=1 // pred_fallthru
      _
    // Predicated region
    $region6: #{q_forward.1} parent=1 // pred_check
      _
    $region7: #{q_forward.1} parent=1 // pred_check_branch
      %20 = sbr.rel (0) target = $region9
    $region8: #{q_forward.1} parent=1 // pred_region
      _
    $region9: #{q_forward.1} parent=1 // pred_fallthru
      _
    // Predicated region
    $region10: #{q_forward.1} parent=1 // pred_check
      _
    $region11: #{q_forward.1} parent=1 // pred_check_branch
      %22 = sbr.rel (0) target = $region13
    $region12: #{q_forward.1} parent=1 // pred_region
      %24 = vsyncadd [#allocation4], 0
      %s25 = sshll.u32 %s2, 4
      %s26 = int_to_ptr.hbm [resolvable:$true] %s25
      %s27 = sshll.u32 [#allocation3], 4
      %s28 = int_to_ptr.vmem [resolvable:$true] %s27
      %33 = dma.hbm_to_vmem [thread:$0]  %s26, 8192, %s28, [#allocation4], 256, 256, 16
    $region13: #{q_forward.1} parent=1 // pred_fallthru
      _
    // Predicated region
    $region14: #{q_forward.1} parent=1 // pred_check
      _
    $region15: #{q_forward.1} parent=1 // pred_check_branch
      %35 = sbr.rel (0) target = $region17
    $region16: #{q_forward.1} parent=1 // pred_region
      _
    $region17: #{q_forward.1} parent=1 // pred_fallthru
      _
    // Predicated region
    $region18: #{q_forward.1} parent=1 // pred_check
      _
    $region19: #{q_forward.1} parent=1 // pred_check_branch
      %37 = sbr.rel (0) target = $region21
    $region20: #{q_forward.1} parent=1 // pred_region
      _
    $region21: #{q_forward.1} parent=1 // pred_fallthru
      _
    // Predicated region
    $region22: #{q_forward.1} parent=1 // pred_check
      _
    $region23: #{q_forward.1} parent=1 // pred_check_branch
      %39 = sbr.rel (0) target = $region25
    $region24: #{q_forward.1} parent=1 // pred_region
      %41 = vsyncadd [#allocation6], 0
      %s42 = sshll.u32 %s5, 4
      %s43 = int_to_ptr.hbm [resolvable:$true] %s42
      %s44 = sshll.u32 [#allocation5], 4
      %s45 = int_to_ptr.vmem [resolvable:$true] %s44
      %50 = dma.hbm_to_vmem [thread:$0]  %s43, 8192, %s45, [#allocation6], 128, 128, 8
    $region25: #{q_forward.1} parent=1 // pred_fallthru
      _
    // Predicated region
    $region26: #{q_forward.1} parent=1 // pred_check
      _
    $region27: #{q_forward.1} parent=1 // pred_check_branch
      %52 = sbr.rel (0) target = $region29
    $region28: #{q_forward.1} parent=1 // pred_region
      _
    $region29: #{q_forward.1} parent=1 // pred_fallthru
      _
    // Predicated region
    $region30: #{q_forward.1} parent=1 // pred_check
      _
    $region31: #{q_forward.1} parent=1 // pred_check_branch
      %54 = sbr.rel (0) target = $region33
    $region32: #{q_forward.1} parent=1 // pred_region
      _
    $region33: #{q_forward.1} parent=1 // pred_fallthru
      _
    // Predicated region
    $region34: #{q_forward.1} parent=1 // pred_check
      _
    $region35: #{q_forward.1} parent=1 // pred_check_branch
      %56 = sbr.rel (0) target = $region37
    $region36: #{q_forward.1} parent=1 // pred_region
      _
    $region37: #{q_forward.1} parent=1 // pred_fallthru
      _
    // Predicated region
    $region38: #{q_forward.1} parent=1 // pred_check
      _
    $region39: #{q_forward.1} parent=1 // pred_check_branch
      %58 = sbr.rel (0) target = $region41
    $region40: #{q_forward.1} parent=1 // pred_region
      %60 = dma.done [#allocation4], 8192
    $region41: #{q_forward.1} parent=1 // pred_fallthru
      _
    // Predicated region
    $region42: #{q_forward.1} parent=1 // pred_check
      _
    $region43: #{q_forward.1} parent=1 // pred_check_branch
      %62 = sbr.rel (0) target = $region45
    $region44: #{q_forward.1} parent=1 // pred_region
      %64 = dma.done [#allocation6], 8192
    $region45: #{q_forward.1} parent=1 // pred_fallthru
      _
    %v66 = vld [vmem:[%s0] sm:$0xf]
    %68 = vst [vmem:[#allocation1] ss:$4 sm:$0xff] %v66
    %v69 = vld.sshfl [vmem:[#allocation1] sm:$0xff pattern:$0x73625140]
    %v70 = vld.sshfl [vmem:[#allocation1 + $0x8] sm:$0xff pattern:$0x73625140]
    %v73 = vpack.c.bf16 %v69, %v69
    %v74 = vpack.c.bf16 %v70, %v70
    %v75 = vld [vmem:[%s1] sm:$0x3]
    %v76 = vpack.c.bf16 %v75, %v75
    %v77 = vld [vmem:[#allocation3] sm:$0xff]
    %v78 = vld [vmem:[#allocation3 + $0x8] sm:$0xff]
    %v79 = vld [vmem:[#allocation3 + $0x10] sm:$0xff]
    %v80 = vld [vmem:[#allocation3 + $0x18] sm:$0xff]
    %v81 = vld [vmem:[#allocation3 + $0x20] sm:$0xff]
    %v82 = vld [vmem:[#allocation3 + $0x28] sm:$0xff]
    %v83 = vld [vmem:[#allocation3 + $0x30] sm:$0xff]
    %v84 = vld [vmem:[#allocation3 + $0x38] sm:$0xff]
    %v85 = vld [vmem:[#allocation3 + $0x40] sm:$0xff]
    %v86 = vld [vmem:[#allocation3 + $0x48] sm:$0xff]
    %v87 = vld [vmem:[#allocation3 + $0x50] sm:$0xff]
    %v88 = vld [vmem:[#allocation3 + $0x58] sm:$0xff]
    %v89 = vld [vmem:[#allocation3 + $0x60] sm:$0xff]
    %v90 = vld [vmem:[#allocation3 + $0x68] sm:$0xff]
    %v91 = vld [vmem:[#allocation3 + $0x70] sm:$0xff]
    %v92 = vld [vmem:[#allocation3 + $0x78] sm:$0xff]
    %v93 = vld [vmem:[#allocation3 + $0x80] sm:$0xff]
    %v94 = vld [vmem:[#allocation3 + $0x88] sm:$0xff]
    %v95 = vld [vmem:[#allocation3 + $0x90] sm:$0xff]
    %v96 = vld [vmem:[#allocation3 + $0x98] sm:$0xff]
    %v97 = vld [vmem:[#allocation3 + $0xa0] sm:$0xff]
    %v98 = vld [vmem:[#allocation3 + $0xa8] sm:$0xff]
    %v99 = vld [vmem:[#allocation3 + $0xb0] sm:$0xff]
    %v100 = vld [vmem:[#allocation3 + $0xb8] sm:$0xff]
    %v101 = vld [vmem:[#allocation3 + $0xc0] sm:$0xff]
    %v102 = vld [vmem:[#allocation3 + $0xc8] sm:$0xff]
    %v103 = vld [vmem:[#allocation3 + $0xd0] sm:$0xff]
    %v104 = vld [vmem:[#allocation3 + $0xd8] sm:$0xff]
    %v105 = vld [vmem:[#allocation3 + $0xe0] sm:$0xff]
    %v106 = vld [vmem:[#allocation3 + $0xe8] sm:$0xff]
    %v107 = vld [vmem:[#allocation3 + $0xf0] sm:$0xff]
    %v108 = vld [vmem:[#allocation3 + $0xf8] sm:$0xff]
    %v109 = vld [vmem:[#allocation3 + $0x100] sm:$0xff]
    %v110 = vld [vmem:[#allocation3 + $0x108] sm:$0xff]
    %v111 = vld [vmem:[#allocation3 + $0x110] sm:$0xff]
    %v112 = vld [vmem:[#allocation3 + $0x118] sm:$0xff]
    %v113 = vld [vmem:[#allocation3 + $0x120] sm:$0xff]
    %v114 = vld [vmem:[#allocation3 + $0x128] sm:$0xff]
    %v115 = vld [vmem:[#allocation3 + $0x130] sm:$0xff]
    %v116 = vld [vmem:[#allocation3 + $0x138] sm:$0xff]
    %v117 = vld [vmem:[#allocation3 + $0x140] sm:$0xff]
    %v118 = vld [vmem:[#allocation3 + $0x148] sm:$0xff]
    %v119 = vld [vmem:[#allocation3 + $0x150] sm:$0xff]
    %v120 = vld [vmem:[#allocation3 + $0x158] sm:$0xff]
    %v121 = vld [vmem:[#allocation3 + $0x160] sm:$0xff]
    %v122 = vld [vmem:[#allocation3 + $0x168] sm:$0xff]
    %v123 = vld [vmem:[#allocation3 + $0x170] sm:$0xff]
    %v124 = vld [vmem:[#allocation3 + $0x178] sm:$0xff]
    %v125 = vld [vmem:[#allocation3 + $0x180] sm:$0xff]
    %v126 = vld [vmem:[#allocation3 + $0x188] sm:$0xff]
    %v127 = vld [vmem:[#allocation3 + $0x190] sm:$0xff]
    %v128 = vld [vmem:[#allocation3 + $0x198] sm:$0xff]
    %v129 = vld [vmem:[#allocation3 + $0x1a0] sm:$0xff]
    %v130 = vld [vmem:[#allocation3 + $0x1a8] sm:$0xff]
    %v131 = vld [vmem:[#allocation3 + $0x1b0] sm:$0xff]
    %v132 = vld [vmem:[#allocation3 + $0x1b8] sm:$0xff]
    %v133 = vld [vmem:[#allocation3 + $0x1c0] sm:$0xff]
    %v134 = vld [vmem:[#allocation3 + $0x1c8] sm:$0xff]
    %v135 = vld [vmem:[#allocation3 + $0x1d0] sm:$0xff]
    %v136 = vld [vmem:[#allocation3 + $0x1d8] sm:$0xff]
    %v137 = vld [vmem:[#allocation3 + $0x1e0] sm:$0xff]
    %v138 = vld [vmem:[#allocation3 + $0x1e8] sm:$0xff]
    %v139 = vld [vmem:[#allocation3 + $0x1f0] sm:$0xff]
    %v140 = vld [vmem:[#allocation3 + $0x1f8] sm:$0xff]
    %v141 = vld [vmem:[%s3] sm:$0xff]
    %143 = vst [vmem:[#allocation1] ss:$4 sm:$0xff] %v141
    %v144 = vld.sshfl [vmem:[#allocation1] sm:$0xff pattern:$0x73625140]
    %v145 = vld.sshfl [vmem:[#allocation1 + $0x8] sm:$0xff pattern:$0x73625140]
    %v146 = vld.sshfl [vmem:[#allocation1 + $0x10] sm:$0xff pattern:$0x73625140]
    %v147 = vld.sshfl [vmem:[#allocation1 + $0x18] sm:$0xff pattern:$0x73625140]
    %vm148 = vcmask 23552
    %v150 = vsel %vm148, %v76, 0
    %vm152 = vcmask 1040384
    %vm153 = vcmask 1041408
    %v154 = vsel %vm152, 4294967295, 65535
    %v155 = vsel %vm153, %v154, 0
    %v156 = vand.u32 %v144, %v155
    %v158 = vand.u32 %v145, %v155
    %v160 = vand.u32 %v146, %v155
    %v162 = vand.u32 %v147, %v155
    %164 = vmatpush.bf16.msra.mxu0 0
    %165 = vmatpush.bf16.msra.mxu0 0
    %166 = vmatpush.bf16.msra.mxu0 0
    %167 = vmatpush.bf16.msra.mxu0 0
    %168 = vmatpush.bf16.msra.mxu0 0
    %169 = vmatpush.bf16.msra.mxu0 0
    %170 = vmatpush.bf16.msra.mxu0 0
    %171 = vmatpush.bf16.msra.mxu0 %v156
    %172 = vmatmul.bf16.gmra.mxu0 %v150
    %v173 = vpop.f32.mrf.mxu0
    %v174 = vadd.f32 0.0, %v173
    %v175 = vpop.f32.mrf.mxu0
    %176 = vdwg.mxu0
    %177 = vmatpush.bf16.msra.mxu0 0
    %178 = vmatpush.bf16.msra.mxu0 0
    %179 = vmatpush.bf16.msra.mxu0 0
    %180 = vmatpush.bf16.msra.mxu0 0
    %181 = vmatpush.bf16.msra.mxu0 0
    %182 = vmatpush.bf16.msra.mxu0 0
    %183 = vmatpush.bf16.msra.mxu0 0
    %184 = vmatpush.bf16.msra.mxu0 %v158
    %185 = vmatmul.bf16.gmra.mxu0 %v150
    %v186 = vpop.f32.mrf.mxu0
    %v187 = vadd.f32 0.0, %v186
    %v188 = vpop.f32.mrf.mxu0
    %189 = vdwg.mxu0
    %190 = vmatpush.bf16.msra.mxu0 0
    %191 = vmatpush.bf16.msra.mxu0 0
    %192 = vmatpush.bf16.msra.mxu0 0
    %193 = vmatpush.bf16.msra.mxu0 0
    %194 = vmatpush.bf16.msra.mxu0 0
    %195 = vmatpush.bf16.msra.mxu0 0
    %196 = vmatpush.bf16.msra.mxu0 0
    %197 = vmatpush.bf16.msra.mxu0 %v160
    %198 = vmatmul.bf16.gmra.mxu0 %v150
    %v199 = vpop.f32.mrf.mxu0
    %v200 = vadd.f32 0.0, %v199
    %v201 = vpop.f32.mrf.mxu0
    %202 = vdwg.mxu0
    %203 = vmatpush.bf16.msra.mxu0 0
    %204 = vmatpush.bf16.msra.mxu0 0
    %205 = vmatpush.bf16.msra.mxu0 0
    %206 = vmatpush.bf16.msra.mxu0 0
    %207 = vmatpush.bf16.msra.mxu0 0
    %208 = vmatpush.bf16.msra.mxu0 0
    %209 = vmatpush.bf16.msra.mxu0 0
    %210 = vmatpush.bf16.msra.mxu0 %v162
    %211 = vmatmul.bf16.gmra.mxu0 %v150
    %v212 = vpop.f32.mrf.mxu0
    %v213 = vadd.f32 0.0, %v212
    %v214 = vpop.f32.mrf.mxu0
    %215 = vdwg.mxu0
    %v280 = vunpack.c.l.b16 %v77
    %v281 = vunpack.c.h.b16 %v77
    %v282 = vunpack.c.l.b16 %v78
    %v283 = vunpack.c.h.b16 %v78
    %v284 = vunpack.c.l.b16 %v79
    %v285 = vunpack.c.h.b16 %v79
    %v286 = vunpack.c.l.b16 %v80
    %v287 = vunpack.c.h.b16 %v80
    %v288 = vunpack.c.l.b16 %v81
    %v289 = vunpack.c.h.b16 %v81
    %v290 = vunpack.c.l.b16 %v82
    %v291 = vunpack.c.h.b16 %v82
    %v292 = vunpack.c.l.b16 %v83
    %v293 = vunpack.c.h.b16 %v83
    %v294 = vunpack.c.l.b16 %v84
    %v295 = vunpack.c.h.b16 %v84
    %v296 = vunpack.c.l.b16 %v85
    %v297 = vunpack.c.h.b16 %v85
    %v298 = vunpack.c.l.b16 %v86
    %v299 = vunpack.c.h.b16 %v86
    %v300 = vunpack.c.l.b16 %v87
    %v301 = vunpack.c.h.b16 %v87
    %v302 = vunpack.c.l.b16 %v88
    %v303 = vunpack.c.h.b16 %v88
    %v304 = vunpack.c.l.b16 %v89
    %v305 = vunpack.c.h.b16 %v89
    %v306 = vunpack.c.l.b16 %v90
    %v307 = vunpack.c.h.b16 %v90
    %v308 = vunpack.c.l.b16 %v91
    %v309 = vunpack.c.h.b16 %v91
    %v310 = vunpack.c.l.b16 %v92
    %v311 = vunpack.c.h.b16 %v92
    %v312 = vunpack.c.l.b16 %v93
    %v313 = vunpack.c.h.b16 %v93
    %v314 = vunpack.c.l.b16 %v94
    %v315 = vunpack.c.h.b16 %v94
    %v316 = vunpack.c.l.b16 %v95
    %v317 = vunpack.c.h.b16 %v95
    %v318 = vunpack.c.l.b16 %v96
    %v319 = vunpack.c.h.b16 %v96
    %v320 = vunpack.c.l.b16 %v97
    %v321 = vunpack.c.h.b16 %v97
    %v322 = vunpack.c.l.b16 %v98
    %v323 = vunpack.c.h.b16 %v98
    %v324 = vunpack.c.l.b16 %v99
    %v325 = vunpack.c.h.b16 %v99
    %v326 = vunpack.c.l.b16 %v100
    %v327 = vunpack.c.h.b16 %v100
    %v328 = vunpack.c.l.b16 %v101
    %v329 = vunpack.c.h.b16 %v101
    %v330 = vunpack.c.l.b16 %v102
    %v331 = vunpack.c.h.b16 %v102
    %v332 = vunpack.c.l.b16 %v103
    %v333 = vunpack.c.h.b16 %v103
    %v334 = vunpack.c.l.b16 %v104
    %v335 = vunpack.c.h.b16 %v104
    %v336 = vunpack.c.l.b16 %v105
    %v337 = vunpack.c.h.b16 %v105
    %v338 = vunpack.c.l.b16 %v106
    %v339 = vunpack.c.h.b16 %v106
    %v340 = vunpack.c.l.b16 %v107
    %v341 = vunpack.c.h.b16 %v107
    %v342 = vunpack.c.l.b16 %v108
    %v343 = vunpack.c.h.b16 %v108
    %v344 = vunpack.c.l.b16 %v109
    %v345 = vunpack.c.h.b16 %v109
    %v346 = vunpack.c.l.b16 %v110
    %v347 = vunpack.c.h.b16 %v110
    %v348 = vunpack.c.l.b16 %v111
    %v349 = vunpack.c.h.b16 %v111
    %v350 = vunpack.c.l.b16 %v112
    %v351 = vunpack.c.h.b16 %v112
    %v352 = vunpack.c.l.b16 %v113
    %v353 = vunpack.c.h.b16 %v113
    %v354 = vunpack.c.l.b16 %v114
    %v355 = vunpack.c.h.b16 %v114
    %v356 = vunpack.c.l.b16 %v115
    %v357 = vunpack.c.h.b16 %v115
    %v358 = vunpack.c.l.b16 %v116
    %v359 = vunpack.c.h.b16 %v116
    %v360 = vunpack.c.l.b16 %v117
    %v361 = vunpack.c.h.b16 %v117
    %v362 = vunpack.c.l.b16 %v118
    %v363 = vunpack.c.h.b16 %v118
    %v364 = vunpack.c.l.b16 %v119
    %v365 = vunpack.c.h.b16 %v119
    %v366 = vunpack.c.l.b16 %v120
    %v367 = vunpack.c.h.b16 %v120
    %v368 = vunpack.c.l.b16 %v121
    %v369 = vunpack.c.h.b16 %v121
    %v370 = vunpack.c.l.b16 %v122
    %v371 = vunpack.c.h.b16 %v122
    %v372 = vunpack.c.l.b16 %v123
    %v373 = vunpack.c.h.b16 %v123
    %v374 = vunpack.c.l.b16 %v124
    %v375 = vunpack.c.h.b16 %v124
    %v376 = vunpack.c.l.b16 %v125
    %v377 = vunpack.c.h.b16 %v125
    %v378 = vunpack.c.l.b16 %v126
    %v379 = vunpack.c.h.b16 %v126
    %v380 = vunpack.c.l.b16 %v127
    %v381 = vunpack.c.h.b16 %v127
    %v382 = vunpack.c.l.b16 %v128
    %v383 = vunpack.c.h.b16 %v128
    %v384 = vunpack.c.l.b16 %v129
    %v385 = vunpack.c.h.b16 %v129
    %v386 = vunpack.c.l.b16 %v130
    %v387 = vunpack.c.h.b16 %v130
    %v388 = vunpack.c.l.b16 %v131
    %v389 = vunpack.c.h.b16 %v131
    %v390 = vunpack.c.l.b16 %v132
    %v391 = vunpack.c.h.b16 %v132
    %v392 = vunpack.c.l.b16 %v133
    %v393 = vunpack.c.h.b16 %v133
    %v394 = vunpack.c.l.b16 %v134
    %v395 = vunpack.c.h.b16 %v134
    %v396 = vunpack.c.l.b16 %v135
    %v397 = vunpack.c.h.b16 %v135
    %v398 = vunpack.c.l.b16 %v136
    %v399 = vunpack.c.h.b16 %v136
    %v400 = vunpack.c.l.b16 %v137
    %v401 = vunpack.c.h.b16 %v137
    %v402 = vunpack.c.l.b16 %v138
    %v403 = vunpack.c.h.b16 %v138
    %v404 = vunpack.c.l.b16 %v139
    %v405 = vunpack.c.h.b16 %v139
    %v406 = vunpack.c.l.b16 %v140
    %v407 = vunpack.c.h.b16 %v140
    %v408 = vpack.c.b16 %v284, %v280
    %v409 = vpack.c.b16 %v285, %v281
    %v410 = vpack.c.b16 %v286, %v282
    %v411 = vpack.c.b16 %v287, %v283
    %v412 = vpack.c.b16 %v292, %v288
    %v413 = vpack.c.b16 %v293, %v289
    %v414 = vpack.c.b16 %v294, %v290
    %v415 = vpack.c.b16 %v295, %v291
    %v416 = vpack.c.b16 %v300, %v296
    %v417 = vpack.c.b16 %v301, %v297
    %v418 = vpack.c.b16 %v302, %v298
    %v419 = vpack.c.b16 %v303, %v299
    %v420 = vpack.c.b16 %v308, %v304
    %v421 = vpack.c.b16 %v309, %v305
    %v422 = vpack.c.b16 %v310, %v306
    %v423 = vpack.c.b16 %v311, %v307
    %v424 = vpack.c.b16 %v316, %v312
    %v425 = vpack.c.b16 %v317, %v313
    %v426 = vpack.c.b16 %v318, %v314
    %v427 = vpack.c.b16 %v319, %v315
    %v428 = vpack.c.b16 %v324, %v320
    %v429 = vpack.c.b16 %v325, %v321
    %v430 = vpack.c.b16 %v326, %v322
    %v431 = vpack.c.b16 %v327, %v323
    %v432 = vpack.c.b16 %v332, %v328
    %v433 = vpack.c.b16 %v333, %v329
    %v434 = vpack.c.b16 %v334, %v330
    %v435 = vpack.c.b16 %v335, %v331
    %v436 = vpack.c.b16 %v340, %v336
    %v437 = vpack.c.b16 %v341, %v337
    %v438 = vpack.c.b16 %v342, %v338
    %v439 = vpack.c.b16 %v343, %v339
    %v440 = vpack.c.b16 %v348, %v344
    %v441 = vpack.c.b16 %v349, %v345
    %v442 = vpack.c.b16 %v350, %v346
    %v443 = vpack.c.b16 %v351, %v347
    %v444 = vpack.c.b16 %v356, %v352
    %v445 = vpack.c.b16 %v357, %v353
    %v446 = vpack.c.b16 %v358, %v354
    %v447 = vpack.c.b16 %v359, %v355
    %v448 = vpack.c.b16 %v364, %v360
    %v449 = vpack.c.b16 %v365, %v361
    %v450 = vpack.c.b16 %v366, %v362
    %v451 = vpack.c.b16 %v367, %v363
    %v452 = vpack.c.b16 %v372, %v368
    %v453 = vpack.c.b16 %v373, %v369
    %v454 = vpack.c.b16 %v374, %v370
    %v455 = vpack.c.b16 %v375, %v371
    %v456 = vpack.c.b16 %v380, %v376
    %v457 = vpack.c.b16 %v381, %v377
    %v458 = vpack.c.b16 %v382, %v378
    %v459 = vpack.c.b16 %v383, %v379
    %v460 = vpack.c.b16 %v388, %v384
    %v461 = vpack.c.b16 %v389, %v385
    %v462 = vpack.c.b16 %v390, %v386
    %v463 = vpack.c.b16 %v391, %v387
    %v464 = vpack.c.b16 %v396, %v392
    %v465 = vpack.c.b16 %v397, %v393
    %v466 = vpack.c.b16 %v398, %v394
    %v467 = vpack.c.b16 %v399, %v395
    %v468 = vpack.c.b16 %v404, %v400
    %v469 = vpack.c.b16 %v405, %v401
    %v470 = vpack.c.b16 %v406, %v402
    %v471 = vpack.c.b16 %v407, %v403
    %536 = vmatpush.bf16.msra.mxu0 %v436
    %537 = vmatpush.bf16.msra.mxu0 %v432
    %538 = vmatpush.bf16.msra.mxu0 %v428
    %539 = vmatpush.bf16.msra.mxu0 %v424
    %540 = vmatpush.bf16.msra.mxu0 %v420
    %541 = vmatpush.bf16.msra.mxu0 %v416
    %542 = vmatpush.bf16.msra.mxu0 %v412
    %543 = vmatpush.bf16.msra.mxu0 %v408
    %544 = vmatmul.bf16.gmra.mxu0 %v73
    %v545 = vpop.f32.mrf.mxu0
    %v546 = vadd.f32 %v174, %v545
    %v547 = vpop.f32.mrf.mxu0
    %548 = vdwg.mxu0
    %549 = vmatpush.bf16.msra.mxu0 %v468
    %550 = vmatpush.bf16.msra.mxu0 %v464
    %551 = vmatpush.bf16.msra.mxu0 %v460
    %552 = vmatpush.bf16.msra.mxu0 %v456
    %553 = vmatpush.bf16.msra.mxu0 %v452
    %554 = vmatpush.bf16.msra.mxu0 %v448
    %555 = vmatpush.bf16.msra.mxu0 %v444
    %556 = vmatpush.bf16.msra.mxu0 %v440
    %557 = vmatmul.bf16.gmra.mxu0 %v74
    %v558 = vpop.f32.mrf.mxu0
    %v559 = vadd.f32 %v546, %v558
    %v560 = vpop.f32.mrf.mxu0
    %561 = vdwg.mxu0
    %562 = vmatpush.bf16.msra.mxu0 %v437
    %563 = vmatpush.bf16.msra.mxu0 %v433
    %564 = vmatpush.bf16.msra.mxu0 %v429
    %565 = vmatpush.bf16.msra.mxu0 %v425
    %566 = vmatpush.bf16.msra.mxu0 %v421
    %567 = vmatpush.bf16.msra.mxu0 %v417
    %568 = vmatpush.bf16.msra.mxu0 %v413
    %569 = vmatpush.bf16.msra.mxu0 %v409
    %570 = vmatmul.bf16.gmra.mxu0 %v73
    %v571 = vpop.f32.mrf.mxu0
    %v572 = vadd.f32 %v187, %v571
    %v573 = vpop.f32.mrf.mxu0
    %574 = vdwg.mxu0
    %575 = vmatpush.bf16.msra.mxu0 %v469
    %576 = vmatpush.bf16.msra.mxu0 %v465
    %577 = vmatpush.bf16.msra.mxu0 %v461
    %578 = vmatpush.bf16.msra.mxu0 %v457
    %579 = vmatpush.bf16.msra.mxu0 %v453
    %580 = vmatpush.bf16.msra.mxu0 %v449
    %581 = vmatpush.bf16.msra.mxu0 %v445
    %582 = vmatpush.bf16.msra.mxu0 %v441
    %583 = vmatmul.bf16.gmra.mxu0 %v74
    %v584 = vpop.f32.mrf.mxu0
    %v585 = vadd.f32 %v572, %v584
    %v586 = vpop.f32.mrf.mxu0
    %587 = vdwg.mxu0
    %588 = vmatpush.bf16.msra.mxu0 %v438
    %589 = vmatpush.bf16.msra.mxu0 %v434
    %590 = vmatpush.bf16.msra.mxu0 %v430
    %591 = vmatpush.bf16.msra.mxu0 %v426
    %592 = vmatpush.bf16.msra.mxu0 %v422
    %593 = vmatpush.bf16.msra.mxu0 %v418
    %594 = vmatpush.bf16.msra.mxu0 %v414
    %595 = vmatpush.bf16.msra.mxu0 %v410
    %596 = vmatmul.bf16.gmra.mxu0 %v73
    %v597 = vpop.f32.mrf.mxu0
    %v598 = vadd.f32 %v200, %v597
    %v599 = vpop.f32.mrf.mxu0
    %600 = vdwg.mxu0
    %601 = vmatpush.bf16.msra.mxu0 %v470
    %602 = vmatpush.bf16.msra.mxu0 %v466
    %603 = vmatpush.bf16.msra.mxu0 %v462
    %604 = vmatpush.bf16.msra.mxu0 %v458
    %605 = vmatpush.bf16.msra.mxu0 %v454
    %606 = vmatpush.bf16.msra.mxu0 %v450
    %607 = vmatpush.bf16.msra.mxu0 %v446
    %608 = vmatpush.bf16.msra.mxu0 %v442
    %609 = vmatmul.bf16.gmra.mxu0 %v74
    %v610 = vpop.f32.mrf.mxu0
    %v611 = vadd.f32 %v598, %v610
    %v612 = vpop.f32.mrf.mxu0
    %613 = vdwg.mxu0
    %614 = vmatpush.bf16.msra.mxu0 %v439
    %615 = vmatpush.bf16.msra.mxu0 %v435
    %616 = vmatpush.bf16.msra.mxu0 %v431
    %617 = vmatpush.bf16.msra.mxu0 %v427
    %618 = vmatpush.bf16.msra.mxu0 %v423
    %619 = vmatpush.bf16.msra.mxu0 %v419
    %620 = vmatpush.bf16.msra.mxu0 %v415
    %621 = vmatpush.bf16.msra.mxu0 %v411
    %622 = vmatmul.bf16.gmra.mxu0 %v73
    %v623 = vpop.f32.mrf.mxu0
    %v624 = vadd.f32 %v213, %v623
    %v625 = vpop.f32.mrf.mxu0
    %626 = vdwg.mxu0
    %627 = vmatpush.bf16.msra.mxu0 %v471
    %628 = vmatpush.bf16.msra.mxu0 %v467
    %629 = vmatpush.bf16.msra.mxu0 %v463
    %630 = vmatpush.bf16.msra.mxu0 %v459
    %631 = vmatpush.bf16.msra.mxu0 %v455
    %632 = vmatpush.bf16.msra.mxu0 %v451
    %633 = vmatpush.bf16.msra.mxu0 %v447
    %634 = vmatpush.bf16.msra.mxu0 %v443
    %635 = vmatmul.bf16.gmra.mxu0 %v74
    %v636 = vpop.f32.mrf.mxu0
    %v637 = vadd.f32 %v624, %v636
    %v638 = vpop.f32.mrf.mxu0
    %639 = vdwg.mxu0
    %v640 = vld [vmem:[%s4] sm:$0xf]
    %v642 = vperm.slane %v640, 0
    %v643 = vperm.slane %v640, 1
    %v644 = vperm.slane %v640, 2
    %v645 = vperm.slane %v640, 3
    %v650 = vadd.f32 %v559, %v642
    %v651 = vadd.f32 %v585, %v643
    %v652 = vadd.f32 %v611, %v644
    %v653 = vadd.f32 %v637, %v645
    %v654 = vmax.f32 %v650, 0.0
    %v655 = vmax.f32 %v651, 0.0
    %v656 = vmax.f32 %v652, 0.0
    %v657 = vmax.f32 %v653, 0.0
    %v658 = vpack.c.bf16 %v654, %v654
    %v659 = vpack.c.bf16 %v655, %v655
    %v660 = vpack.c.bf16 %v656, %v656
    %v661 = vpack.c.bf16 %v657, %v657
    %v662 = vld [vmem:[#allocation5] sm:$0xff]
    %v663 = vld [vmem:[#allocation5 + $0x8] sm:$0xff]
    %v664 = vld [vmem:[#allocation5 + $0x10] sm:$0xff]
    %v665 = vld [vmem:[#allocation5 + $0x18] sm:$0xff]
    %v666 = vld [vmem:[#allocation5 + $0x20] sm:$0xff]
    %v667 = vld [vmem:[#allocation5 + $0x28] sm:$0xff]
    %v668 = vld [vmem:[#allocation5 + $0x30] sm:$0xff]
    %v669 = vld [vmem:[#allocation5 + $0x38] sm:$0xff]
    %v670 = vld [vmem:[#allocation5 + $0x40] sm:$0xff]
    %v671 = vld [vmem:[#allocation5 + $0x48] sm:$0xff]
    %v672 = vld [vmem:[#allocation5 + $0x50] sm:$0xff]
    %v673 = vld [vmem:[#allocation5 + $0x58] sm:$0xff]
    %v674 = vld [vmem:[#allocation5 + $0x60] sm:$0xff]
    %v675 = vld [vmem:[#allocation5 + $0x68] sm:$0xff]
    %v676 = vld [vmem:[#allocation5 + $0x70] sm:$0xff]
    %v677 = vld [vmem:[#allocation5 + $0x78] sm:$0xff]
    %v678 = vld [vmem:[#allocation5 + $0x80] sm:$0xff]
    %v679 = vld [vmem:[#allocation5 + $0x88] sm:$0xff]
    %v680 = vld [vmem:[#allocation5 + $0x90] sm:$0xff]
    %v681 = vld [vmem:[#allocation5 + $0x98] sm:$0xff]
    %v682 = vld [vmem:[#allocation5 + $0xa0] sm:$0xff]
    %v683 = vld [vmem:[#allocation5 + $0xa8] sm:$0xff]
    %v684 = vld [vmem:[#allocation5 + $0xb0] sm:$0xff]
    %v685 = vld [vmem:[#allocation5 + $0xb8] sm:$0xff]
    %v686 = vld [vmem:[#allocation5 + $0xc0] sm:$0xff]
    %v687 = vld [vmem:[#allocation5 + $0xc8] sm:$0xff]
    %v688 = vld [vmem:[#allocation5 + $0xd0] sm:$0xff]
    %v689 = vld [vmem:[#allocation5 + $0xd8] sm:$0xff]
    %v690 = vld [vmem:[#allocation5 + $0xe0] sm:$0xff]
    %v691 = vld [vmem:[#allocation5 + $0xe8] sm:$0xff]
    %v692 = vld [vmem:[#allocation5 + $0xf0] sm:$0xff]
    %v693 = vld [vmem:[#allocation5 + $0xf8] sm:$0xff]
    %v694 = vld [vmem:[#allocation5 + $0x100] sm:$0xff]
    %v695 = vld [vmem:[#allocation5 + $0x108] sm:$0xff]
    %v696 = vld [vmem:[#allocation5 + $0x110] sm:$0xff]
    %v697 = vld [vmem:[#allocation5 + $0x118] sm:$0xff]
    %v698 = vld [vmem:[#allocation5 + $0x120] sm:$0xff]
    %v699 = vld [vmem:[#allocation5 + $0x128] sm:$0xff]
    %v700 = vld [vmem:[#allocation5 + $0x130] sm:$0xff]
    %v701 = vld [vmem:[#allocation5 + $0x138] sm:$0xff]
    %v702 = vld [vmem:[#allocation5 + $0x140] sm:$0xff]
    %v703 = vld [vmem:[#allocation5 + $0x148] sm:$0xff]
    %v704 = vld [vmem:[#allocation5 + $0x150] sm:$0xff]
    %v705 = vld [vmem:[#allocation5 + $0x158] sm:$0xff]
    %v706 = vld [vmem:[#allocation5 + $0x160] sm:$0xff]
    %v707 = vld [vmem:[#allocation5 + $0x168] sm:$0xff]
    %v708 = vld [vmem:[#allocation5 + $0x170] sm:$0xff]
    %v709 = vld [vmem:[#allocation5 + $0x178] sm:$0xff]
    %v710 = vld [vmem:[#allocation5 + $0x180] sm:$0xff]
    %v711 = vld [vmem:[#allocation5 + $0x188] sm:$0xff]
    %v712 = vld [vmem:[#allocation5 + $0x190] sm:$0xff]
    %v713 = vld [vmem:[#allocation5 + $0x198] sm:$0xff]
    %v714 = vld [vmem:[#allocation5 + $0x1a0] sm:$0xff]
    %v715 = vld [vmem:[#allocation5 + $0x1a8] sm:$0xff]
    %v716 = vld [vmem:[#allocation5 + $0x1b0] sm:$0xff]
    %v717 = vld [vmem:[#allocation5 + $0x1b8] sm:$0xff]
    %v718 = vld [vmem:[#allocation5 + $0x1c0] sm:$0xff]
    %v719 = vld [vmem:[#allocation5 + $0x1c8] sm:$0xff]
    %v720 = vld [vmem:[#allocation5 + $0x1d0] sm:$0xff]
    %v721 = vld [vmem:[#allocation5 + $0x1d8] sm:$0xff]
    %v722 = vld [vmem:[#allocation5 + $0x1e0] sm:$0xff]
    %v723 = vld [vmem:[#allocation5 + $0x1e8] sm:$0xff]
    %v724 = vld [vmem:[#allocation5 + $0x1f0] sm:$0xff]
    %v725 = vld [vmem:[#allocation5 + $0x1f8] sm:$0xff]
    %v726 = vld [vmem:[%s6] sm:$0x3]
    %v728 = vperm.slane %v726, 0
    %v729 = vperm.slane %v726, 1
    %v796 = vunpack.c.l.b16 %v662
    %v797 = vunpack.c.h.b16 %v662
    %v798 = vunpack.c.l.b16 %v663
    %v799 = vunpack.c.h.b16 %v663
    %v800 = vunpack.c.l.b16 %v664
    %v801 = vunpack.c.h.b16 %v664
    %v802 = vunpack.c.l.b16 %v665
    %v803 = vunpack.c.h.b16 %v665
    %v804 = vunpack.c.l.b16 %v666
    %v805 = vunpack.c.h.b16 %v666
    %v806 = vunpack.c.l.b16 %v667
    %v807 = vunpack.c.h.b16 %v667
    %v808 = vunpack.c.l.b16 %v668
    %v809 = vunpack.c.h.b16 %v668
    %v810 = vunpack.c.l.b16 %v669
    %v811 = vunpack.c.h.b16 %v669
    %v812 = vunpack.c.l.b16 %v670
    %v813 = vunpack.c.h.b16 %v670
    %v814 = vunpack.c.l.b16 %v671
    %v815 = vunpack.c.h.b16 %v671
    %v816 = vunpack.c.l.b16 %v672
    %v817 = vunpack.c.h.b16 %v672
    %v818 = vunpack.c.l.b16 %v673
    %v819 = vunpack.c.h.b16 %v673
    %v820 = vunpack.c.l.b16 %v674
    %v821 = vunpack.c.h.b16 %v674
    %v822 = vunpack.c.l.b16 %v675
    %v823 = vunpack.c.h.b16 %v675
    %v824 = vunpack.c.l.b16 %v676
    %v825 = vunpack.c.h.b16 %v676
    %v826 = vunpack.c.l.b16 %v677
    %v827 = vunpack.c.h.b16 %v677
    %v828 = vunpack.c.l.b16 %v678
    %v829 = vunpack.c.h.b16 %v678
    %v830 = vunpack.c.l.b16 %v679
    %v831 = vunpack.c.h.b16 %v679
    %v832 = vunpack.c.l.b16 %v680
    %v833 = vunpack.c.h.b16 %v680
    %v834 = vunpack.c.l.b16 %v681
    %v835 = vunpack.c.h.b16 %v681
    %v836 = vunpack.c.l.b16 %v682
    %v837 = vunpack.c.h.b16 %v682
    %v838 = vunpack.c.l.b16 %v683
    %v839 = vunpack.c.h.b16 %v683
    %v840 = vunpack.c.l.b16 %v684
    %v841 = vunpack.c.h.b16 %v684
    %v842 = vunpack.c.l.b16 %v685
    %v843 = vunpack.c.h.b16 %v685
    %v844 = vunpack.c.l.b16 %v686
    %v845 = vunpack.c.h.b16 %v686
    %v846 = vunpack.c.l.b16 %v687
    %v847 = vunpack.c.h.b16 %v687
    %v848 = vunpack.c.l.b16 %v688
    %v849 = vunpack.c.h.b16 %v688
    %v850 = vunpack.c.l.b16 %v689
    %v851 = vunpack.c.h.b16 %v689
    %v852 = vunpack.c.l.b16 %v690
    %v853 = vunpack.c.h.b16 %v690
    %v854 = vunpack.c.l.b16 %v691
    %v855 = vunpack.c.h.b16 %v691
    %v856 = vunpack.c.l.b16 %v692
    %v857 = vunpack.c.h.b16 %v692
    %v858 = vunpack.c.l.b16 %v693
    %v859 = vunpack.c.h.b16 %v693
    %v860 = vunpack.c.l.b16 %v694
    %v861 = vunpack.c.h.b16 %v694
    %v862 = vunpack.c.l.b16 %v695
    %v863 = vunpack.c.h.b16 %v695
    %v864 = vunpack.c.l.b16 %v696
    %v865 = vunpack.c.h.b16 %v696
    %v866 = vunpack.c.l.b16 %v697
    %v867 = vunpack.c.h.b16 %v697
    %v868 = vunpack.c.l.b16 %v698
    %v869 = vunpack.c.h.b16 %v698
    %v870 = vunpack.c.l.b16 %v699
    %v871 = vunpack.c.h.b16 %v699
    %v872 = vunpack.c.l.b16 %v700
    %v873 = vunpack.c.h.b16 %v700
    %v874 = vunpack.c.l.b16 %v701
    %v875 = vunpack.c.h.b16 %v701
    %v876 = vunpack.c.l.b16 %v702
    %v877 = vunpack.c.h.b16 %v702
    %v878 = vunpack.c.l.b16 %v703
    %v879 = vunpack.c.h.b16 %v703
    %v880 = vunpack.c.l.b16 %v704
    %v881 = vunpack.c.h.b16 %v704
    %v882 = vunpack.c.l.b16 %v705
    %v883 = vunpack.c.h.b16 %v705
    %v884 = vunpack.c.l.b16 %v706
    %v885 = vunpack.c.h.b16 %v706
    %v886 = vunpack.c.l.b16 %v707
    %v887 = vunpack.c.h.b16 %v707
    %v888 = vunpack.c.l.b16 %v708
    %v889 = vunpack.c.h.b16 %v708
    %v890 = vunpack.c.l.b16 %v709
    %v891 = vunpack.c.h.b16 %v709
    %v892 = vunpack.c.l.b16 %v710
    %v893 = vunpack.c.h.b16 %v710
    %v894 = vunpack.c.l.b16 %v711
    %v895 = vunpack.c.h.b16 %v711
    %v896 = vunpack.c.l.b16 %v712
    %v897 = vunpack.c.h.b16 %v712
    %v898 = vunpack.c.l.b16 %v713
    %v899 = vunpack.c.h.b16 %v713
    %v900 = vunpack.c.l.b16 %v714
    %v901 = vunpack.c.h.b16 %v714
    %v902 = vunpack.c.l.b16 %v715
    %v903 = vunpack.c.h.b16 %v715
    %v904 = vunpack.c.l.b16 %v716
    %v905 = vunpack.c.h.b16 %v716
    %v906 = vunpack.c.l.b16 %v717
    %v907 = vunpack.c.h.b16 %v717
    %v908 = vunpack.c.l.b16 %v718
    %v909 = vunpack.c.h.b16 %v718
    %v910 = vunpack.c.l.b16 %v719
    %v911 = vunpack.c.h.b16 %v719
    %v912 = vunpack.c.l.b16 %v720
    %v913 = vunpack.c.h.b16 %v720
    %v914 = vunpack.c.l.b16 %v721
    %v915 = vunpack.c.h.b16 %v721
    %v916 = vunpack.c.l.b16 %v722
    %v917 = vunpack.c.h.b16 %v722
    %v918 = vunpack.c.l.b16 %v723
    %v919 = vunpack.c.h.b16 %v723
    %v920 = vunpack.c.l.b16 %v724
    %v921 = vunpack.c.h.b16 %v724
    %v922 = vunpack.c.l.b16 %v725
    %v923 = vunpack.c.h.b16 %v725
    %v924 = vpack.c.b16 %v798, %v796
    %v925 = vpack.c.b16 %v799, %v797
    %v926 = vpack.c.b16 %v802, %v800
    %v927 = vpack.c.b16 %v803, %v801
    %v928 = vpack.c.b16 %v806, %v804
    %v929 = vpack.c.b16 %v807, %v805
    %v930 = vpack.c.b16 %v810, %v808
    %v931 = vpack.c.b16 %v811, %v809
    %v932 = vpack.c.b16 %v814, %v812
    %v933 = vpack.c.b16 %v815, %v813
    %v934 = vpack.c.b16 %v818, %v816
    %v935 = vpack.c.b16 %v819, %v817
    %v936 = vpack.c.b16 %v822, %v820
    %v937 = vpack.c.b16 %v823, %v821
    %v938 = vpack.c.b16 %v826, %v824
    %v939 = vpack.c.b16 %v827, %v825
    %v940 = vpack.c.b16 %v830, %v828
    %v941 = vpack.c.b16 %v831, %v829
    %v942 = vpack.c.b16 %v834, %v832
    %v943 = vpack.c.b16 %v835, %v833
    %v944 = vpack.c.b16 %v838, %v836
    %v945 = vpack.c.b16 %v839, %v837
    %v946 = vpack.c.b16 %v842, %v840
    %v947 = vpack.c.b16 %v843, %v841
    %v948 = vpack.c.b16 %v846, %v844
    %v949 = vpack.c.b16 %v847, %v845
    %v950 = vpack.c.b16 %v850, %v848
    %v951 = vpack.c.b16 %v851, %v849
    %v952 = vpack.c.b16 %v854, %v852
    %v953 = vpack.c.b16 %v855, %v853
    %v954 = vpack.c.b16 %v858, %v856
    %v955 = vpack.c.b16 %v859, %v857
    %v956 = vpack.c.b16 %v862, %v860
    %v957 = vpack.c.b16 %v863, %v861
    %v958 = vpack.c.b16 %v866, %v864
    %v959 = vpack.c.b16 %v867, %v865
    %v960 = vpack.c.b16 %v870, %v868
    %v961 = vpack.c.b16 %v871, %v869
    %v962 = vpack.c.b16 %v874, %v872
    %v963 = vpack.c.b16 %v875, %v873
    %v964 = vpack.c.b16 %v878, %v876
    %v965 = vpack.c.b16 %v879, %v877
    %v966 = vpack.c.b16 %v882, %v880
    %v967 = vpack.c.b16 %v883, %v881
    %v968 = vpack.c.b16 %v886, %v884
    %v969 = vpack.c.b16 %v887, %v885
    %v970 = vpack.c.b16 %v890, %v888
    %v971 = vpack.c.b16 %v891, %v889
    %v972 = vpack.c.b16 %v894, %v892
    %v973 = vpack.c.b16 %v895, %v893
    %v974 = vpack.c.b16 %v898, %v896
    %v975 = vpack.c.b16 %v899, %v897
    %v976 = vpack.c.b16 %v902, %v900
    %v977 = vpack.c.b16 %v903, %v901
    %v978 = vpack.c.b16 %v906, %v904
    %v979 = vpack.c.b16 %v907, %v905
    %v980 = vpack.c.b16 %v910, %v908
    %v981 = vpack.c.b16 %v911, %v909
    %v982 = vpack.c.b16 %v914, %v912
    %v983 = vpack.c.b16 %v915, %v913
    %v984 = vpack.c.b16 %v918, %v916
    %v985 = vpack.c.b16 %v919, %v917
    %v986 = vpack.c.b16 %v922, %v920
    %v987 = vpack.c.b16 %v923, %v921
    %1052 = vmatpush.bf16.msra.mxu0 %v938
    %1053 = vmatpush.bf16.msra.mxu0 %v936
    %1054 = vmatpush.bf16.msra.mxu0 %v934
    %1055 = vmatpush.bf16.msra.mxu0 %v932
    %1056 = vmatpush.bf16.msra.mxu0 %v930
    %1057 = vmatpush.bf16.msra.mxu0 %v928
    %1058 = vmatpush.bf16.msra.mxu0 %v926
    %1059 = vmatpush.bf16.msra.mxu0 %v924
    %1060 = vmatmul.bf16.gmra.mxu0 %v658
    %v1061 = vpop.f32.mrf.mxu0
    %v1062 = vadd.f32 %v728, %v1061
    %v1063 = vpop.f32.mrf.mxu0
    %1064 = vdwg.mxu0
    %1065 = vmatpush.bf16.msra.mxu0 %v954
    %1066 = vmatpush.bf16.msra.mxu0 %v952
    %1067 = vmatpush.bf16.msra.mxu0 %v950
    %1068 = vmatpush.bf16.msra.mxu0 %v948
    %1069 = vmatpush.bf16.msra.mxu0 %v946
    %1070 = vmatpush.bf16.msra.mxu0 %v944
    %1071 = vmatpush.bf16.msra.mxu0 %v942
    %1072 = vmatpush.bf16.msra.mxu0 %v940
    %1073 = vmatmul.bf16.gmra.mxu0 %v659
    %v1074 = vpop.f32.mrf.mxu0
    %v1075 = vadd.f32 %v1062, %v1074
    %v1076 = vpop.f32.mrf.mxu0
    %1077 = vdwg.mxu0
    %1078 = vmatpush.bf16.msra.mxu0 %v970
    %1079 = vmatpush.bf16.msra.mxu0 %v968
    %1080 = vmatpush.bf16.msra.mxu0 %v966
    %1081 = vmatpush.bf16.msra.mxu0 %v964
    %1082 = vmatpush.bf16.msra.mxu0 %v962
    %1083 = vmatpush.bf16.msra.mxu0 %v960
    %1084 = vmatpush.bf16.msra.mxu0 %v958
    %1085 = vmatpush.bf16.msra.mxu0 %v956
    %1086 = vmatmul.bf16.gmra.mxu0 %v660
    %v1087 = vpop.f32.mrf.mxu0
    %v1088 = vadd.f32 %v1075, %v1087
    %v1089 = vpop.f32.mrf.mxu0
    %1090 = vdwg.mxu0
    %1091 = vmatpush.bf16.msra.mxu0 %v986
    %1092 = vmatpush.bf16.msra.mxu0 %v984
    %1093 = vmatpush.bf16.msra.mxu0 %v982
    %1094 = vmatpush.bf16.msra.mxu0 %v980
    %1095 = vmatpush.bf16.msra.mxu0 %v978
    %1096 = vmatpush.bf16.msra.mxu0 %v976
    %1097 = vmatpush.bf16.msra.mxu0 %v974
    %1098 = vmatpush.bf16.msra.mxu0 %v972
    %1099 = vmatmul.bf16.gmra.mxu0 %v661
    %v1100 = vpop.f32.mrf.mxu0
    %v1101 = vadd.f32 %v1088, %v1100
    %v1102 = vpop.f32.mrf.mxu0
    %1103 = vdwg.mxu0
    %1104 = vmatpush.bf16.msra.mxu0 %v939
    %1105 = vmatpush.bf16.msra.mxu0 %v937
    %1106 = vmatpush.bf16.msra.mxu0 %v935
    %1107 = vmatpush.bf16.msra.mxu0 %v933
    %1108 = vmatpush.bf16.msra.mxu0 %v931
    %1109 = vmatpush.bf16.msra.mxu0 %v929
    %1110 = vmatpush.bf16.msra.mxu0 %v927
    %1111 = vmatpush.bf16.msra.mxu0 %v925
    %1112 = vmatmul.bf16.gmra.mxu0 %v658
    %v1113 = vpop.f32.mrf.mxu0
    %v1114 = vadd.f32 %v729, %v1113
    %v1115 = vpop.f32.mrf.mxu0
    %1116 = vdwg.mxu0
    %1117 = vmatpush.bf16.msra.mxu0 %v955
    %1118 = vmatpush.bf16.msra.mxu0 %v953
    %1119 = vmatpush.bf16.msra.mxu0 %v951
    %1120 = vmatpush.bf16.msra.mxu0 %v949
    %1121 = vmatpush.bf16.msra.mxu0 %v947
    %1122 = vmatpush.bf16.msra.mxu0 %v945
    %1123 = vmatpush.bf16.msra.mxu0 %v943
    %1124 = vmatpush.bf16.msra.mxu0 %v941
    %1125 = vmatmul.bf16.gmra.mxu0 %v659
    %v1126 = vpop.f32.mrf.mxu0
    %v1127 = vadd.f32 %v1114, %v1126
    %v1128 = vpop.f32.mrf.mxu0
    %1129 = vdwg.mxu0
    %1130 = vmatpush.bf16.msra.mxu0 %v971
    %1131 = vmatpush.bf16.msra.mxu0 %v969
    %1132 = vmatpush.bf16.msra.mxu0 %v967
    %1133 = vmatpush.bf16.msra.mxu0 %v965
    %1134 = vmatpush.bf16.msra.mxu0 %v963
    %1135 = vmatpush.bf16.msra.mxu0 %v961
    %1136 = vmatpush.bf16.msra.mxu0 %v959
    %1137 = vmatpush.bf16.msra.mxu0 %v957
    %1138 = vmatmul.bf16.gmra.mxu0 %v660
    %v1139 = vpop.f32.mrf.mxu0
    %v1140 = vadd.f32 %v1127, %v1139
    %v1141 = vpop.f32.mrf.mxu0
    %1142 = vdwg.mxu0
    %1143 = vmatpush.bf16.msra.mxu0 %v987
    %1144 = vmatpush.bf16.msra.mxu0 %v985
    %1145 = vmatpush.bf16.msra.mxu0 %v983
    %1146 = vmatpush.bf16.msra.mxu0 %v981
    %1147 = vmatpush.bf16.msra.mxu0 %v979
    %1148 = vmatpush.bf16.msra.mxu0 %v977
    %1149 = vmatpush.bf16.msra.mxu0 %v975
    %1150 = vmatpush.bf16.msra.mxu0 %v973
    %1151 = vmatmul.bf16.gmra.mxu0 %v661
    %v1152 = vpop.f32.mrf.mxu0
    %v1153 = vadd.f32 %v1140, %v1152
    %v1154 = vpop.f32.mrf.mxu0
    %1155 = vdwg.mxu0
    %v1156 = vmax.f32 %v1101, 0.0
    %v1157 = vmax.f32 %v1153, 0.0
    %v1158 = vld [vmem:[%s7] sm:$0x3]
    %v1160 = vperm.slane %v1158, 0
    %v1161 = vperm.slane %v1158, 1
    %v1164 = vmul.f32 %v1156, %v1160
    %v1165 = vmul.f32 %v1157, %v1161
    %v1166 = vsel %vm153, %v1164, 0.0
    %v1167 = vsel %vm153, %v1165, 0.0
    %v1168 = vadd.f32 %v1166, %v1167
    %1169 = vadd.xlane.f32.xlu0 %v1168
    %v1170 = vpop.xlane.xlu0 %1169
    %s1171 = sld [smem:[#allocation2]]
    %v1172 = vstv %s1171
    %v1173 = vadd.f32 %v1170, %v1172
    %vm1174 = vcmask 1024
    %1175 = vst.msk [vmem:[%s9] sm:$0x3] %vm1174, %v1173
    // Predicated region
    $region46: #{q_forward.1} parent=1 // pred_check
      _
    $region47: #{q_forward.1} parent=1 // pred_check_branch
      %1177 = sbr.rel (0) target = $region49
    $region48: #{q_forward.1} parent=1 // pred_region
      _
    $region49: #{q_forward.1} parent=1 // pred_fallthru
      _
    // Predicated region
    $region50: #{q_forward.1} parent=1 // pred_check
      _
    $region51: #{q_forward.1} parent=1 // pred_check_branch
      %1179 = sbr.rel (0) target = $region53
    $region52: #{q_forward.1} parent=1 // pred_region
      _
    $region53: #{q_forward.1} parent=1 // pred_fallthru
      _
    %1180 = vsyncpa [#allocation4], 1
    %1181 = vsyncpa [#allocation6], 1

</llo_original>
